<compile_context>
chip_gen: v5e
topology: v5e:2x2
jax: 0.10.0
libtpu: 0.0.40
codegen_flags: <defaults>
</compile_context>

<pallas_src>
import jax
import jax.numpy as jnp
from jax.experimental import pallas as pl
from jax.experimental.pallas import tpu as pltpu


def attention_output_kernel(h_ref, res_ref, w_ref, vec_ref, out_ref):
    # Dense: (TN, H) @ (H, H) on the MXU; bf16 operands, f32 accumulation.
    x = jnp.dot(h_ref[...], w_ref[...], preferred_element_type=jnp.float32)

    bias = vec_ref[0:1, :].astype(jnp.float32)   # (1, H)
    gamma = vec_ref[1:2, :].astype(jnp.float32)  # (1, H)
    beta = vec_ref[2:3, :].astype(jnp.float32)   # (1, H)

    # Dropout is identity in eval mode; residual add in f32.
    x = x + bias + res_ref[...].astype(jnp.float32)

    # LayerNorm over the hidden axis, eps = 1e-12 (matches nn.LayerNorm),
    # all math in f32 (v5e VPU/EUP have no bf16 arithmetic).
    mean = jnp.mean(x, axis=-1, keepdims=True)
    centered = x - mean
    var = jnp.mean(centered * centered, axis=-1, keepdims=True)
    normed = centered * jax.lax.rsqrt(var + 1e-12)
    out_ref[...] = (normed * gamma + beta).astype(out_ref.dtype)


def _pick_tile_n(n):
    """Largest token tile <= 1024 that still yields >= 2 grid steps when
    possible (keeps both v7x TensorCores busy on the parallel axis)."""
    for t in (1024, 512, 256, 128, 64, 32, 16, 8):
        if pl.cdiv(n, t) >= 2:
            return t
    return 8


def lxmert_attention_output(hidden_states, input_tensor, params):
    """hidden_states, input_tensor: (B, S, H).  Returns (B, S, H), same dtype."""
    B, S, H = hidden_states.shape
    N = B * S

    # Flatten tokens; no pad / no dtype cast here (avoids an extra HBM
    # round-trip before the kernel).  The ragged last block (if any) is
    # handled by Pallas masking the out-of-bounds output rows.
    h2 = hidden_states.reshape(N, H)
    r2 = input_tensor.reshape(N, H)

    tn = _pick_tile_n(N)
    grid = (pl.cdiv(N, tn),)

    tok_spec = pl.BlockSpec((tn, H), lambda i: (i, 0))   # per-step token tile
    w_spec = pl.BlockSpec((H, H), lambda i: (0, 0))      # resident weight (DMA'd once)
    vec_spec = pl.BlockSpec((3, H), lambda i: (0, 0))    # bias/gamma/beta (resident)

    out = pl.pallas_call(
        attention_output_kernel,
        out_shape=jax.ShapeDtypeStruct((N, H), hidden_states.dtype),
        grid=grid,
        in_specs=[tok_spec, tok_spec, w_spec, vec_spec],
        out_specs=tok_spec,
        compiler_params=pltpu.CompilerParams(
            dimension_semantics=("parallel",),
            # <= ~48 MiB: headroom under v7x's 64 MiB physical VMEM while
            # comfortably fitting double-buffered 1024-token tiles at H=768.
            vmem_limit_bytes=48 << 20,
        ),
    )(h2, r2, params["w"], params["vecs"])

    return out.reshape(B, S, H)


def make_params(key, hidden, dtype=jnp.bfloat16):
    k1, k2 = jax.random.split(key, 2)
    # PyTorch nn.Linear computes x @ weight.T + bias; store W^T (H_in, H_out)
    # so the kernel does a plain, lane-dense x @ w.  One-time cast at init
    # (not a per-forward pre-pass).
    weight_t = (0.02 * jax.random.normal(k1, (hidden, hidden), jnp.float32)).astype(dtype)
    bias = 0.02 * jax.random.normal(k2, (hidden,), jnp.float32)
    gamma = jnp.ones((hidden,), jnp.float32)
    beta = jnp.zeros((hidden,), jnp.float32)
    vecs = jnp.stack([bias, gamma, beta], axis=0).astype(dtype)  # (3, H)
    return {"w": weight_t, "vecs": vecs}


if __name__ == "__main__":
    # Small config consistent with the module: batch=2, seq=8, hidden=32.
    B, S, H = 2, 8, 32

    key = jax.random.PRNGKey(0)
    kp, kh, kr = jax.random.split(key, 3)

    params = make_params(kp, H)
    hidden_states = jax.random.normal(kh, (B, S, H), jnp.float32).astype(jnp.bfloat16)
    input_tensor = jax.random.normal(kr, (B, S, H), jnp.float32).astype(jnp.bfloat16)

    out = lxmert_attention_output(hidden_states, input_tensor, params)
    jax.block_until_ready(out)

    # Pure-JAX f32 reference on the same bf16 inputs/params
    # (eval-mode semantics: dropout = identity).
    h32 = hidden_states.astype(jnp.float32)
    r32 = input_tensor.astype(jnp.float32)
    w32 = params["w"].astype(jnp.float32)
    b32, g32, be32 = [v.astype(jnp.float32) for v in params["vecs"]]
    x = jnp.einsum("bsh,hk->bsk", h32, w32) + b32.reshape(1, 1, H) + r32
    mean = x.mean(-1, keepdims=True)
    var = ((x - mean) ** 2).mean(-1, keepdims=True)
    ref = (x - mean) * jax.lax.rsqrt(var + 1e-12)
    ref = ref * g32.reshape(1, 1, H) + be32.reshape(1, 1, H)

    assert out.shape == (B, S, H)
    assert out.dtype == jnp.bfloat16
    max_err = jnp.max(jnp.abs(out.astype(jnp.float32) - ref))
    assert max_err < 3e-2, f"max abs err {max_err}"
    print("KERNEL_OK")
</pallas_src>

<mosaic_0001>
module attributes {stable_mosaic.version = 11 : i64} {
  func.func @attention_output_kernel(%arg0: i32, %arg1: memref<8x32xbf16, #tpu.memory_space<vmem>>, %arg2: memref<8x32xbf16, #tpu.memory_space<vmem>>, %arg3: memref<32x32xbf16, #tpu.memory_space<vmem>>, %arg4: memref<3x32xbf16, #tpu.memory_space<vmem>>, %arg5: memref<8x32xbf16, #tpu.memory_space<vmem>>) attributes {dimension_semantics = [#tpu.dimension_semantics<parallel>], iteration_bounds = array<i64: 2>, scalar_prefetch = 0 : i64, scratch_operands = 0 : i64, tpu.core_type = #tpu.core_type<tc>, window_params = [{transform_indices = @transform_0, window_bounds = array<i64: 8, 32>}, {transform_indices = @transform_1, window_bounds = array<i64: 8, 32>}, {pipeline_mode = #tpu.pipeline_mode<synchronous>, transform_indices = @transform_2, window_bounds = array<i64: 32, 32>}, {pipeline_mode = #tpu.pipeline_mode<synchronous>, transform_indices = @transform_3, window_bounds = array<i64: 3, 32>}, {transform_indices = @transform_4, window_bounds = array<i64: 8, 32>}]} {
    %c0 = arith.constant 0 : index
    %c0_0 = arith.constant 0 : index
    %0 = vector.load %arg1[%c0, %c0_0] : memref<8x32xbf16, #tpu.memory_space<vmem>>, vector<8x32xbf16>
    %c0_1 = arith.constant 0 : index
    %c0_2 = arith.constant 0 : index
    %1 = vector.load %arg3[%c0_1, %c0_2] : memref<32x32xbf16, #tpu.memory_space<vmem>>, vector<32x32xbf16>
    %cst = arith.constant dense<0.000000e+00> : vector<8x32xf32>
    %2 = tpu.matmul %0, %1, %cst {dimension_numbers = #tpu.dot_dimension_numbers<[1], [0], [0], [1], [0, 0, 1, 1], [], []>} : vector<8x32xbf16>, vector<32x32xbf16>, vector<8x32xf32> -> vector<8x32xf32>
    %c0_3 = arith.constant 0 : index
    %c0_4 = arith.constant 0 : index
    %3 = vector.load %arg4[%c0_3, %c0_4] : memref<3x32xbf16, #tpu.memory_space<vmem>>, vector<1x32xbf16>
    %4 = arith.extf %3 : vector<1x32xbf16> to vector<1x32xf32>
    %c1 = arith.constant 1 : index
    %c0_5 = arith.constant 0 : index
    %5 = vector.load %arg4[%c1, %c0_5] : memref<3x32xbf16, #tpu.memory_space<vmem>>, vector<1x32xbf16>
    %6 = arith.extf %5 : vector<1x32xbf16> to vector<1x32xf32>
    %c2 = arith.constant 2 : index
    %c0_6 = arith.constant 0 : index
    %7 = vector.load %arg4[%c2, %c0_6] : memref<3x32xbf16, #tpu.memory_space<vmem>>, vector<1x32xbf16>
    %8 = arith.extf %7 : vector<1x32xbf16> to vector<1x32xf32>
    %9 = vector.broadcast %4 : vector<1x32xf32> to vector<8x32xf32>
    %10 = arith.addf %2, %9 : vector<8x32xf32>
    %c0_7 = arith.constant 0 : index
    %c0_8 = arith.constant 0 : index
    %11 = vector.load %arg2[%c0_7, %c0_8] : memref<8x32xbf16, #tpu.memory_space<vmem>>, vector<8x32xbf16>
    %12 = arith.extf %11 : vector<8x32xbf16> to vector<8x32xf32>
    %13 = arith.addf %10, %12 : vector<8x32xf32>
    %cst_9 = arith.constant dense<0.000000e+00> : vector<8xf32>
    %14 = vector.multi_reduction <add>, %13, %cst_9 [1] : vector<8x32xf32> to vector<8xf32>
    %15 = vector.shape_cast %14 : vector<8xf32> to vector<8x1xf32>
    %cst_10 = arith.constant 3.200000e+01 : f32
    %16 = vector.broadcast %cst_10 : f32 to vector<8x1xf32>
    %17 = arith.divf %15, %16 : vector<8x1xf32>
    %18 = vector.broadcast %17 : vector<8x1xf32> to vector<8x32xf32>
    %19 = arith.subf %13, %18 : vector<8x32xf32>
    %20 = arith.mulf %19, %19 : vector<8x32xf32>
    %cst_11 = arith.constant dense<0.000000e+00> : vector<8xf32>
    %21 = vector.multi_reduction <add>, %20, %cst_11 [1] : vector<8x32xf32> to vector<8xf32>
    %22 = vector.shape_cast %21 : vector<8xf32> to vector<8x1xf32>
    %cst_12 = arith.constant 3.200000e+01 : f32
    %23 = vector.broadcast %cst_12 : f32 to vector<8x1xf32>
    %24 = arith.divf %22, %23 : vector<8x1xf32>
    %cst_13 = arith.constant 9.99999996E-13 : f32
    %25 = vector.broadcast %cst_13 : f32 to vector<8x1xf32>
    %26 = arith.addf %24, %25 : vector<8x1xf32>
    %27 = math.rsqrt %26 : vector<8x1xf32>
    %28 = vector.broadcast %27 : vector<8x1xf32> to vector<8x32xf32>
    %29 = arith.mulf %19, %28 : vector<8x32xf32>
    %30 = vector.broadcast %6 : vector<1x32xf32> to vector<8x32xf32>
    %31 = arith.mulf %29, %30 : vector<8x32xf32>
    %32 = vector.broadcast %8 : vector<1x32xf32> to vector<8x32xf32>
    %33 = arith.addf %31, %32 : vector<8x32xf32>
    %34 = arith.truncf %33 : vector<8x32xf32> to vector<8x32xbf16>
    %c0_14 = arith.constant 0 : index
    %c0_15 = arith.constant 0 : index
    %35 = vector.load %arg5[%c0_14, %c0_15] : memref<8x32xbf16, #tpu.memory_space<vmem>>, vector<8x32xbf16>
    tpu.vector_store %arg5[%c0_14, %c0_15], %34 {strides = array<i32>} : memref<8x32xbf16, #tpu.memory_space<vmem>>, vector<8x32xbf16>,
    return
  }
  func.func @transform_0(%arg0: i32) -> (i32, i32) {
    %c0_i32 = arith.constant 0 : i32
    %c0_i32_0 = arith.constant 0 : i32
    return %arg0, %c0_i32 : i32, i32
  }
  func.func @transform_1(%arg0: i32) -> (i32, i32) {
    %c0_i32 = arith.constant 0 : i32
    %c0_i32_0 = arith.constant 0 : i32
    return %arg0, %c0_i32 : i32, i32
  }
  func.func @transform_2(%arg0: i32) -> (i32, i32) {
    %c0_i32 = arith.constant 0 : i32
    %c0_i32_0 = arith.constant 0 : i32
    %c0_i32_1 = arith.constant 0 : i32
    return %c0_i32, %c0_i32_0 : i32, i32
  }
  func.func @transform_3(%arg0: i32) -> (i32, i32) {
    %c0_i32 = arith.constant 0 : i32
    %c0_i32_0 = arith.constant 0 : i32
    %c0_i32_1 = arith.constant 0 : i32
    return %c0_i32, %c0_i32_0 : i32, i32
  }
  func.func @transform_4(%arg0: i32) -> (i32, i32) {
    %c0_i32 = arith.constant 0 : i32
    %c0_i32_0 = arith.constant 0 : i32
    return %arg0, %c0_i32 : i32, i32
  }
}

</mosaic_0001>

<llo_original>
// kernel: tpu_custom_call.1
$region0: #{tpu_custom_call.1}
  #allocation0 [shape = 'u32[]', space=smem, size = 0x4, offset = 0x4, fixed_abs, tag = 'smem constant byte address 0x4 - core index']
  #allocation1 [shape = 'u32[72,128]{1,0:T(1,128)}', space=vmem, size = 0x9000, scoped, tag = 'internal scratch']
  %s0 = inlined_call_operand.hbm [shape: bf16[16,32], index: 0, kind: input, shape index: {}]
  %s1 = inlined_call_operand.hbm [shape: bf16[16,32], index: 1, kind: input, shape index: {}]
  %s2 = inlined_call_operand.hbm [shape: bf16[32,32], index: 2, kind: input, shape index: {}]
  %s3 = inlined_call_operand.vmem [shape: bf16[3,32], index: 3, kind: input, shape index: {}]
  %s4 = inlined_call_operand.hbm [shape: bf16[16,32], index: 4, kind: output, shape index: {}]
  %s5 = sld [smem:[#allocation0]]
  $region61: #{tpu_custom_call.1} parent=0
    _
  %s7 = ssub.s32 1, %s5
  %s8 = scalar_select 0, %s7, %s5
  $region1: #{tpu_custom_call.1} parent=0
    #allocation2 [shape = 'u8[4096]{0}', space=vmem, size = 0x1000, scoped, tag = 'input window, operand 0']
    #allocation3 [shape = 's32[2]{0}', space=sflag, size = 0x8, scoped, tag = 'scoped memory for tpu_custom_call.1']
    #allocation4 [shape = 's32[2]{0}', space=sflag, size = 0x8, scoped, tag = 'scoped memory for tpu_custom_call.1']
    #allocation5 [shape = 'u8[4096]{0}', space=vmem, size = 0x1000, scoped, tag = 'input window, operand 1']
    #allocation6 [shape = 's32[2]{0}', space=sflag, size = 0x8, scoped, tag = 'scoped memory for tpu_custom_call.1']
    #allocation7 [shape = 'u8[8192]{0}', space=vmem, size = 0x2000, scoped, tag = 'input window, operand 2, single buffered']
    #allocation8 [shape = 'u8[4096]{0}', space=vmem, size = 0x1000, scoped, tag = 'output window, operand 0']
    %9 = vsyncpa [#allocation3], 0
    %s10 = scalar_lea.sflag [#allocation3], 1
    %11 = vsyncpa %s10, 0
    %12 = vsyncpa [#allocation6], 0
    %s13 = scalar_lea.sflag [#allocation6], 1
    %14 = vsyncpa %s13, 0
    %15 = vsyncpa [#allocation4], 0
    %s16 = scalar_lea.sflag [#allocation4], 1
    %17 = vsyncpa %s16, 0
    loop: start=0, step=1, limit=4
    $region2: #{tpu_custom_call.1} parent=1 // loop_pre_header
      _
    $region3: #{tpu_custom_call.1} parent=1 // loop_header
      %s19 = sphi 0, %s23
      %p20 = scmp.ge.s32.totalorder %s19, 4
      %s29 = sphi 0, %s31
      %s32 = sphi 0, %s29
      %s33 = sphi 0, %s32
      %s49 = sphi 0, %s33
      %s55 = sphi 0, %s57
      %s58 = sphi 0, %s55
      %s59 = sphi 0, %s58
      %s75 = sphi 0, %s59
      %s79 = sphi 0, %s79
      %s81 = sphi 0, %s79
      %s82 = sphi 0, %s81
      %s96 = sphi 0, %s82
      %s100 = sphi 0, %s100
      %s102 = sphi 0, %s100
      %s103 = sphi 0, %s102
      %s117 = sphi 0, %s103
      %s123 = sphi 0, %s125
      %s126 = sphi 0, %s123
      %s127 = sphi 0, %s126
      %s143 = sphi 0, %s127
    $region4: #{tpu_custom_call.1} parent=1 // loop_header_branch
      %22 = sbr.rel (%p20) target = $region8
    $region5: #{tpu_custom_call.1} parent=1 // loop_body
      %s24 = ssub.s32 %s19, 1
      %s25 = ssub.s32 %s19, 2
      %s26 = sadd.s32 %s19, 1
      %s27 = ssub.s32 %s19, %s26
      %p28 = scmp.eq.s32.totalorder %s27, 0
      %s30 = sadd.s32 %s29, 1
      %s31 = scalar_select %p28, %s29, %s30
      %p34 = pneg %p28
      %p35 = scmp.eq.s32.totalorder %s19, 1
      %p36 = por %p34, %p35
      %p37 = scmp.ne.s32.totalorder %s29, %s32
      %p38 = scmp.eq.s32.totalorder %s19, 0
      %p39 = por %p37, %p38
      %p40 = scmp.ne.s32.totalorder %s29, %s32
      %p41 = scmp.eq.s32.totalorder %s24, 1
      %p42 = por %p40, %p41
      %p43 = scmp.ne.s32.totalorder %s32, %s33
      %p44 = scmp.eq.s32.totalorder %s24, 0
      %p45 = por %p43, %p44
      %p46 = scmp.ne.s32.totalorder %s32, %s33
      %p47 = scmp.eq.s32.totalorder %s25, 1
      %p48 = por %p46, %p47
      %p50 = scmp.ne.s32.totalorder %s33, %s49
      %p51 = scmp.eq.s32.totalorder %s25, 0
      %p52 = por %p50, %p51
      %s53 = ssub.s32 %s19, %s26
      %p54 = scmp.eq.s32.totalorder %s53, 0
      %s56 = sadd.s32 %s55, 1
      %s57 = scalar_select %p54, %s55, %s56
      %p60 = pneg %p54
      %p61 = scmp.eq.s32.totalorder %s19, 1
      %p62 = por %p60, %p61
      %p63 = scmp.ne.s32.totalorder %s55, %s58
      %p64 = scmp.eq.s32.totalorder %s19, 0
      %p65 = por %p63, %p64
      %p66 = scmp.ne.s32.totalorder %s55, %s58
      %p67 = scmp.eq.s32.totalorder %s24, 1
      %p68 = por %p66, %p67
      %p69 = scmp.ne.s32.totalorder %s58, %s59
      %p70 = scmp.eq.s32.totalorder %s24, 0
      %p71 = por %p69, %p70
      %p72 = scmp.ne.s32.totalorder %s58, %s59
      %p73 = scmp.eq.s32.totalorder %s25, 1
      %p74 = por %p72, %p73
      %p76 = scmp.ne.s32.totalorder %s59, %s75
      %p77 = scmp.eq.s32.totalorder %s25, 0
      %p78 = por %p76, %p77
      %s80 = sadd.s32 %s79, 1
      %p83 = scmp.eq.s32.totalorder %s19, 1
      %p84 = scmp.ne.s32.totalorder %s79, %s81
      %p85 = scmp.eq.s32.totalorder %s19, 0
      %p86 = por %p84, %p85
      %p87 = scmp.ne.s32.totalorder %s79, %s81
      %p88 = scmp.eq.s32.totalorder %s24, 1
      %p89 = por %p87, %p88
      %p90 = scmp.ne.s32.totalorder %s81, %s82
      %p91 = scmp.eq.s32.totalorder %s24, 0
      %p92 = por %p90, %p91
      %p93 = scmp.ne.s32.totalorder %s81, %s82
      %p94 = scmp.eq.s32.totalorder %s25, 1
      %p95 = por %p93, %p94
      %p97 = scmp.ne.s32.totalorder %s82, %s96
      %p98 = scmp.eq.s32.totalorder %s25, 0
      %p99 = por %p97, %p98
      %s101 = sadd.s32 %s100, 1
      %p104 = scmp.eq.s32.totalorder %s19, 1
      %p105 = scmp.ne.s32.totalorder %s100, %s102
      %p106 = scmp.eq.s32.totalorder %s19, 0
      %p107 = por %p105, %p106
      %p108 = scmp.ne.s32.totalorder %s100, %s102
      %p109 = scmp.eq.s32.totalorder %s24, 1
      %p110 = por %p108, %p109
      %p111 = scmp.ne.s32.totalorder %s102, %s103
      %p112 = scmp.eq.s32.totalorder %s24, 0
      %p113 = por %p111, %p112
      %p114 = scmp.ne.s32.totalorder %s102, %s103
      %p115 = scmp.eq.s32.totalorder %s25, 1
      %p116 = por %p114, %p115
      %p118 = scmp.ne.s32.totalorder %s103, %s117
      %p119 = scmp.eq.s32.totalorder %s25, 0
      %p120 = por %p118, %p119
      %s121 = ssub.s32 %s19, %s26
      %p122 = scmp.eq.s32.totalorder %s121, 0
      %s124 = sadd.s32 %s123, 1
      %s125 = scalar_select %p122, %s123, %s124
      %p128 = pneg %p122
      %p129 = scmp.eq.s32.totalorder %s19, 1
      %p130 = por %p128, %p129
      %p131 = scmp.ne.s32.totalorder %s123, %s126
      %p132 = scmp.eq.s32.totalorder %s19, 0
      %p133 = por %p131, %p132
      %p134 = scmp.ne.s32.totalorder %s123, %s126
      %p135 = scmp.eq.s32.totalorder %s24, 1
      %p136 = por %p134, %p135
      %p137 = scmp.ne.s32.totalorder %s126, %s127
      %p138 = scmp.eq.s32.totalorder %s24, 0
      %p139 = por %p137, %p138
      %p140 = scmp.ne.s32.totalorder %s126, %s127
      %p141 = scmp.eq.s32.totalorder %s25, 1
      %p142 = por %p140, %p141
      %p144 = scmp.ne.s32.totalorder %s127, %s143
      %p145 = scmp.eq.s32.totalorder %s25, 0
      %p146 = por %p144, %p145
      %p147 = scmp.le.s32.totalorder 1, %s19
      %p148 = scmp.lt.s32.totalorder %s19, 3
      %p149 = pnand %p147, %p148
      %p150 = pneg %p149
      // Predicated region
      $region9: #{tpu_custom_call.1} parent=5 // pred_check
        _
      $region10: #{tpu_custom_call.1} parent=5 // pred_check_branch
        %152 = sbr.rel (%p149) target = $region12
      $region11: #{tpu_custom_call.1} parent=5 // pred_region
        %s153 = ssub.s32 %s19, 1
        // Predicated region
        $region13: #{tpu_custom_call.1} parent=11 // pred_check
          %p154 = pneg %p92
        $region14: #{tpu_custom_call.1} parent=11 // pred_check_branch
          %156 = sbr.rel (%p154) target = $region16
        $region15: #{tpu_custom_call.1} parent=11 // pred_region
          %158 = vsyncadd [#allocation6], 0
          %s159 = sshll.u32 %s2, 4
          %s160 = int_to_ptr.hbm [resolvable:$true] %s159
          %s161 = sshll.u32 [#allocation7], 4
          %s162 = int_to_ptr.vmem [resolvable:$true] %s161
          %167 = dma.hbm_to_vmem [thread:$0]  %s160, 256, %s162, [#allocation6], 64, 64, 4
        $region16: #{tpu_custom_call.1} parent=11 // pred_fallthru
          _
        // Predicated region
        $region17: #{tpu_custom_call.1} parent=11 // pred_check
          %p168 = pneg %p113
        $region18: #{tpu_custom_call.1} parent=11 // pred_check_branch
          %170 = sbr.rel (%p168) target = $region20
        $region19: #{tpu_custom_call.1} parent=11 // pred_region
          _
        $region20: #{tpu_custom_call.1} parent=11 // pred_fallthru
          _
      $region12: #{tpu_custom_call.1} parent=5 // pred_fallthru
        _
      %p171 = scmp.lt.s32.totalorder %s19, 2
      // Predicated region
      $region21: #{tpu_custom_call.1} parent=5 // pred_check
        %p172 = pneg %p171
      $region22: #{tpu_custom_call.1} parent=5 // pred_check_branch
        %174 = sbr.rel (%p172) target = $region24
      $region23: #{tpu_custom_call.1} parent=5 // pred_region
        // Predicated region
        $region25: #{tpu_custom_call.1} parent=23 // pred_check
          %p175 = pneg %p39
        $region26: #{tpu_custom_call.1} parent=23 // pred_check_branch
          %177 = sbr.rel (%p175) target = $region28
        $region27: #{tpu_custom_call.1} parent=23 // pred_region
          %s178 = sand.u32 %s29, 1
          %s179 = scalar_lea.sflag [#allocation3], %s178
          %s180 = sand.u32 %s29, 1
          %s181 = smul.addr %s180, 4
          %s182 = scalar_lea.vmem [#allocation2], %s181
          %184 = vsyncadd %s179, 0
          %s185 = smul.addr %s19, 4
          %s186 = scalar_lea.hbm %s0, %s185
          %s188 = sshll.u32 %s186, 4
          %s189 = int_to_ptr.hbm [resolvable:$true] %s188
          %s190 = sshll.u32 %s182, 4
          %s191 = int_to_ptr.vmem [resolvable:$true] %s190
          %193 = dma.hbm_to_vmem [thread:$0]  %s189, 64, %s191, %s179
        $region28: #{tpu_custom_call.1} parent=23 // pred_fallthru
          _
        // Predicated region
        $region29: #{tpu_custom_call.1} parent=23 // pred_check
          %p194 = pneg %p65
        $region30: #{tpu_custom_call.1} parent=23 // pred_check_branch
          %196 = sbr.rel (%p194) target = $region32
        $region31: #{tpu_custom_call.1} parent=23 // pred_region
          %s197 = sand.u32 %s19, 1
          %s198 = scalar_lea.sflag [#allocation6], %s197
          %s199 = sand.u32 %s55, 1
          %s200 = smul.addr %s199, 4
          %s201 = scalar_lea.vmem [#allocation5], %s200
          %203 = vsyncadd %s198, 0
          %s204 = smul.addr %s19, 4
          %s205 = scalar_lea.hbm %s1, %s204
          %s207 = sshll.u32 %s205, 4
          %s208 = int_to_ptr.hbm [resolvable:$true] %s207
          %s209 = sshll.u32 %s201, 4
          %s210 = int_to_ptr.vmem [resolvable:$true] %s209
          %212 = dma.hbm_to_vmem [thread:$0]  %s208, 64, %s210, %s198
        $region32: #{tpu_custom_call.1} parent=23 // pred_fallthru
          _
      $region24: #{tpu_custom_call.1} parent=5 // pred_fallthru
        _
      %p213 = scmp.le.s32.totalorder 1, %s19
      %p214 = scmp.lt.s32.totalorder %s19, 3
      %p215 = pnand %p213, %p214
      %p216 = pneg %p215
      // Predicated region
      $region33: #{tpu_custom_call.1} parent=5 // pred_check
        _
      $region34: #{tpu_custom_call.1} parent=5 // pred_check_branch
        %218 = sbr.rel (%p215) target = $region36
      $region35: #{tpu_custom_call.1} parent=5 // pred_region
        %s219 = ssub.s32 %s19, 1
        %s220 = sand.u32 %s32, 1
        %s221 = scalar_lea.sflag [#allocation3], %s220
        %s222 = sand.u32 %s32, 1
        %s223 = smul.addr %s222, 4
        %s224 = scalar_lea.vmem [#allocation2], %s223
        // Predicated region
        $region37: #{tpu_custom_call.1} parent=35 // pred_check
          %p225 = pneg %p45
        $region38: #{tpu_custom_call.1} parent=35 // pred_check_branch
          %227 = sbr.rel (%p225) target = $region40
        $region39: #{tpu_custom_call.1} parent=35 // pred_region
          %229 = dma.done %s221, 64
        $region40: #{tpu_custom_call.1} parent=35 // pred_fallthru
          _
        %s230 = sand.u32 %s24, 1
        %s231 = scalar_lea.sflag [#allocation6], %s230
        %s232 = sand.u32 %s58, 1
        %s233 = smul.addr %s232, 4
        %s234 = scalar_lea.vmem [#allocation5], %s233
        // Predicated region
        $region41: #{tpu_custom_call.1} parent=35 // pred_check
          %p235 = pneg %p71
        $region42: #{tpu_custom_call.1} parent=35 // pred_check_branch
          %237 = sbr.rel (%p235) target = $region44
        $region43: #{tpu_custom_call.1} parent=35 // pred_region
          %239 = dma.done %s231, 64
        $region44: #{tpu_custom_call.1} parent=35 // pred_fallthru
          _
        // Predicated region
        $region45: #{tpu_custom_call.1} parent=35 // pred_check
          %p240 = pneg %p92
        $region46: #{tpu_custom_call.1} parent=35 // pred_check_branch
          %242 = sbr.rel (%p240) target = $region48
        $region47: #{tpu_custom_call.1} parent=35 // pred_region
          %244 = dma.done [#allocation6], 256
        $region48: #{tpu_custom_call.1} parent=35 // pred_fallthru
          _
        %s245 = sand.u32 %s32, 1
        %s246 = scalar_lea.sflag [#allocation3], %s245
        %s247 = sand.u32 %s32, 1
        %s248 = smul.addr %s247, 4
        %s249 = scalar_lea.vmem [#allocation2], %s248
        %p250 = pneg %p45
        %p251 = pneg %p42
        %s252 = sand.u32 %s24, 1
        %s253 = scalar_lea.sflag [#allocation6], %s252
        %s254 = sand.u32 %s58, 1
        %s255 = smul.addr %s254, 4
        %s256 = scalar_lea.vmem [#allocation5], %s255
        %p257 = pneg %p71
        %p258 = pneg %p68
        %p259 = pneg %p92
        %p260 = pneg %p89
        %p261 = pneg %p113
        %p262 = pneg %p110
        %p263 = pneg %p139
        %p264 = pneg %p136
        %s265 = sand.u32 %s126, 1
        %s266 = scalar_lea.sflag [#allocation4], %s265
        %s267 = sand.u32 %s126, 1
        %s268 = smul.addr %s267, 4
        %s269 = scalar_lea.vmem [#allocation8], %s268
        %v271 = vld [vmem:[%s224] sm:$0xf]
        %v272 = vld [vmem:[#allocation7] sm:$0xf]
        %v273 = vld [vmem:[#allocation7 + $0x4] sm:$0xf]
        %v274 = vld [vmem:[#allocation7 + $0x8] sm:$0xf]
        %v275 = vld [vmem:[#allocation7 + $0xc] sm:$0xf]
        %v276 = vld [vmem:[%s3] sm:$0x1]
        %v277 = vunpack.c.l.bf16 %v276
        %v278 = vld [vmem:[%s3] sm:$0x2]
        %v279 = vunpack.c.l.bf16 %v278
        %v280 = vperm.slane %v277, 0
        %v285 = vunpack.c.l.b16 %v272
        %v286 = vunpack.c.l.b16 %v273
        %v287 = vunpack.c.l.b16 %v274
        %v288 = vunpack.c.l.b16 %v275
        %v289 = vpack.c.b16 %v286, %v285
        %v290 = vpack.c.b16 %v288, %v287
        %vm293 = vcmask 261120
        %v295 = vsel %vm293, %v271, 0
        %297 = vmatpush.bf16.msra.mxu0 0
        %298 = vmatpush.bf16.msra.mxu0 0
        %299 = vmatpush.bf16.msra.mxu0 0
        %300 = vmatpush.bf16.msra.mxu0 0
        %301 = vmatpush.bf16.msra.mxu0 0
        %302 = vmatpush.bf16.msra.mxu0 0
        %303 = vmatpush.bf16.msra.mxu0 %v290
        %304 = vmatpush.bf16.msra.mxu0 %v289
        %305 = vmatmul.bf16.gmra.mxu0 %v295
        %v306 = vpop.f32.mrf.mxu0
        %v307 = vadd.f32 %v280, %v306
        %v308 = vpop.f32.mrf.mxu0
        %309 = vdwg.mxu0
        %v310 = vld [vmem:[%s234] sm:$0xf]
        %v311 = vunpack.c.l.bf16 %v310
        %v312 = vadd.f32 %v307, %v311
        %v313 = vsel %vm293, %v312, 0.0
        %314 = vadd.xlane.f32.xlu0 %v313
        %v315 = vpop.xlane.xlu0 %314
        %v316 = vrcp.pop 32.0
        %v317 = vmul.f32 32.0, %v316
        %v318 = vsub.f32 1.0, %v317
        %v319 = vmul.f32 %v316, %v318
        %v320 = vadd.f32 %v316, %v319
        %vm321 = vweird.f32 %v316
        %v322 = vsel %vm321, %v316, %v320
        %v323 = vmul.f32 %v315, %v322
        %v324 = vsub.f32 %v312, %v323
        %v325 = vmul.f32 %v324, %v324
        %v326 = vsel %vm293, %v325, 0.0
        %327 = vadd.xlane.f32.xlu0 %v326
        %v328 = vpop.xlane.xlu0 %327
        %v329 = vmul.f32 %v328, %v322
        %v330 = vadd.f32 %v329, 1e-12
        %v331 = vrsqrt.pop %v330
        %v332 = vmul.f32 %v331, %v330
        %v333 = vmul.f32 %v332, %v331
        %v334 = vmul.f32 0.5, %v333
        %v335 = vsub.f32 1.5, %v334
        %v336 = vmul.f32 %v331, %v335
        %vm337 = vweird.f32 %v330
        %vm338 = vweird.f32 %v331
        %vm339 = vmor %vm337, %vm338
        %v340 = vsel %vm339, %v331, %v336
        %v341 = vmul.f32 %v324, %v340
        %v342 = vperm.slane %v277, 1
        %v343 = vmul.f32 %v341, %v342
        %v344 = vperm.slane %v279, 2
        %v345 = vadd.f32 %v343, %v344
        %v346 = vpack.c.bf16 %v345, %v345
        %vm347 = vcmask 257024
        %348 = vst.msk [vmem:[%s269] sm:$0xf] %vm347, %v346
        %s349 = sand.u32 %s126, 1
        %s350 = scalar_lea.sflag [#allocation4], %s349
        %s351 = sand.u32 %s126, 1
        %s352 = smul.addr %s351, 4
        %s353 = scalar_lea.vmem [#allocation8], %s352
        // Predicated region
        $region49: #{tpu_custom_call.1} parent=35 // pred_check
          %p354 = pneg %p136
        $region50: #{tpu_custom_call.1} parent=35 // pred_check_branch
          %356 = sbr.rel (%p354) target = $region52
        $region51: #{tpu_custom_call.1} parent=35 // pred_region
          %358 = vsyncadd %s350, 0
          %s359 = smul.addr %s24, 4
          %s360 = scalar_lea.hbm %s4, %s359
          %s362 = sshll.u32 %s353, 4
          %s363 = int_to_ptr.vmem [resolvable:$true] %s362
          %s364 = sshll.u32 %s360, 4
          %s365 = int_to_ptr.hbm [resolvable:$true] %s364
          %367 = dma.vmem_to_hbm [thread:$0]  %s363, 64, %s365, %s350
        $region52: #{tpu_custom_call.1} parent=35 // pred_fallthru
          _
      $region36: #{tpu_custom_call.1} parent=5 // pred_fallthru
        _
      %p368 = scmp.le.s32.totalorder 2, %s19
      // Predicated region
      $region53: #{tpu_custom_call.1} parent=5 // pred_check
        %p369 = pneg %p368
      $region54: #{tpu_custom_call.1} parent=5 // pred_check_branch
        %371 = sbr.rel (%p369) target = $region56
      $region55: #{tpu_custom_call.1} parent=5 // pred_region
        %s372 = ssub.s32 %s19, 2
        // Predicated region
        $region57: #{tpu_custom_call.1} parent=55 // pred_check
          %p373 = pneg %p142
        $region58: #{tpu_custom_call.1} parent=55 // pred_check_branch
          %375 = sbr.rel (%p373) target = $region60
        $region59: #{tpu_custom_call.1} parent=55 // pred_region
          %s376 = sand.u32 %s127, 1
          %s377 = scalar_lea.sflag [#allocation4], %s376
          %s378 = sand.u32 %s127, 1
          %s379 = smul.addr %s378, 4
          %s380 = scalar_lea.vmem [#allocation8], %s379
          %382 = dma.done %s377, 64
        $region60: #{tpu_custom_call.1} parent=55 // pred_fallthru
          _
      $region56: #{tpu_custom_call.1} parent=5 // pred_fallthru
        _
    $region6: #{tpu_custom_call.1} parent=1 // loop_footer
      %s23 = sadd.s32 1, %s19
    $region7: #{tpu_custom_call.1} parent=1 // loop_footer_branch
      %18 = sbr.rel target = $region3
    $region8: #{tpu_custom_call.1} parent=1 // loop_exit
      _
    %383 = vsyncpa [#allocation3], 1
    %s384 = scalar_lea.sflag [#allocation3], 1
    %385 = vsyncpa %s384, 1
    %386 = vsyncpa [#allocation6], 1
    %s387 = scalar_lea.sflag [#allocation6], 1
    %388 = vsyncpa %s387, 1
    %389 = vsyncpa [#allocation4], 1
    %s390 = scalar_lea.sflag [#allocation4], 1
    %391 = vsyncpa %s390, 1

</llo_original>
